<compile_context>
chip_gen: v6e
topology: v6e:2x2x1
jax: 0.10.0
libtpu: 0.0.40
codegen_flags: <defaults>
</compile_context>

<pallas_src>
import functools

import jax
import jax.numpy as jnp
from jax.experimental import pallas as pl
from jax.experimental.pallas import tpu as pltpu


def _ensemble_kernel(x_ref, w_ref, b_ref, out_ref, probs_ref, *,
                     num_models, num_classes, inv_num_models, clamp_min,
                     approx_recip):
    # One lane-dense matmul over all heads: (TB, H) @ (H, M*C) -> (TB, M*C).
    logits = jnp.dot(x_ref[...], w_ref[...],
                     preferred_element_type=jnp.float32) + b_ref[...]

    C = num_classes
    prob_segs = []
    acc = None
    # Statically unrolled over ensemble members (M is small & static); each
    # segment is a static lane-slice of the register-resident logits slab.
    for m in range(num_models):
        seg = logits[:, m * C:(m + 1) * C]
        mx = jnp.max(seg, axis=-1, keepdims=True)
        e = jnp.exp(seg - mx)
        denom = jnp.sum(e, axis=-1, keepdims=True)
        if approx_recip:
            prob = e * pl.reciprocal(denom, approx=True)  # EUP slot, ~free
        else:
            prob = e / denom
        prob_segs.append(prob)
        acc = prob if acc is None else acc + prob

    # Single lane-dense (TB, M*C) probs writeback.
    probs_ref[...] = jnp.concatenate(prob_segs, axis=-1).astype(probs_ref.dtype)
    # Mean over models (constant multiply, not divide) + clamp, written once.
    out_ref[...] = jnp.maximum(acc * inv_num_models, clamp_min).astype(out_ref.dtype)


def ensemble_forward(x, weights, biases, *, batch_tile=None,
                     matmul_dtype=jnp.float32,
                     probs_dtype=jnp.float32,   # pass jnp.bfloat16 in production
                     clamp_min=None,
                     approx_recip=True):
    """x: (B, H); weights: (M, H, C); biases: (M, C).

    Returns (output, probs):
      output: (B, C)    averaged & clamped probabilities (f32)
      probs:  (M, B, C) per-model softmax probabilities (probs_dtype)
    """
    B, H = x.shape
    M, Hw, C = weights.shape
    assert Hw == H and biases.shape == (M, C)
    MC = M * C

    if clamp_min is None:
        # torch.clamp(min=1e-40): 1e-40 is subnormal in f32 and TPUs flush
        # subnormals to zero, so the closest faithful floor is f32 min-normal.
        clamp_min = float(jnp.finfo(jnp.float32).tiny)

    # ---- fold the ensemble into one lane-dense weight matrix --------------
    # (In production, pre-fold / pre-cast once at load time rather than per call.)
    w_folded = jnp.transpose(weights, (1, 0, 2)).reshape(H, MC).astype(matmul_dtype)
    b_folded = biases.reshape(1, MC).astype(jnp.float32)
    x_in = x.astype(matmul_dtype)

    # ---- batch tiling ------------------------------------------------------
    if batch_tile is None:
        batch_tile = min(B, 256)  # v6e: raise to 512+; v7x: keep modest (64 MiB VMEM)
        # Ensure >=2 tiles when the batch allows so v7x's 2 TCs both get work.
        if B >= 16 and pl.cdiv(B, batch_tile) < 2:
            batch_tile = pl.cdiv(B, 2)
    tb = max(8, ((batch_tile + 7) // 8) * 8)
    num_tiles = pl.cdiv(B, tb)
    b_pad = num_tiles * tb
    if b_pad != B:
        # Fallback for ragged batches; prefer 8-aligned B to avoid this copy.
        x_in = jnp.pad(x_in, ((0, b_pad - B), (0, 0)))

    # ---- explicit VMEM budget (scoped default is only 16/32 MiB) ----------
    mm_bytes = jnp.dtype(matmul_dtype).itemsize
    pr_bytes = jnp.dtype(probs_dtype).itemsize
    need = (2 * (H * MC * mm_bytes + MC * 4)                       # resident weights/bias
            + 2 * (tb * H * mm_bytes + tb * C * 4 + tb * MC * pr_bytes))  # pipelined I/O
    vmem_limit = int(min(max(need + (8 << 20), 32 << 20), 64 << 20))
    # TODO(synk): if the folded weights exceed the VMEM budget, add a second grid
    # axis over the folded class dim (per-head online softmax) instead of keeping
    # all weights resident.

    kernel = functools.partial(
        _ensemble_kernel,
        num_models=M, num_classes=C,
        inv_num_models=1.0 / M, clamp_min=clamp_min,
        approx_recip=approx_recip)

    out_shape = (
        jax.ShapeDtypeStruct((b_pad, C), jnp.float32),
        jax.ShapeDtypeStruct((b_pad, MC), probs_dtype),
    )

    def build_call(single_buffer_weights):
        wkw = {}
        if single_buffer_weights:
            # Constant-index weights/bias: no point double-buffering a block
            # whose index never changes.
            wkw = dict(pipeline_mode=pl.Buffered(1))
        grid_spec = pltpu.PrefetchScalarGridSpec(
            num_scalar_prefetch=0,
            grid=(num_tiles,),
            in_specs=[
                pl.BlockSpec((tb, H), lambda i: (i, 0)),          # x batch tile
                pl.BlockSpec((H, MC), lambda i: (0, 0), **wkw),   # folded weights (resident)
                pl.BlockSpec((1, MC), lambda i: (0, 0), **wkw),   # folded biases  (resident)
            ],
            out_specs=[
                pl.BlockSpec((tb, C), lambda i: (i, 0)),          # averaged output
                pl.BlockSpec((tb, MC), lambda i: (i, 0)),         # lane-dense probs slab
            ],
        )
        return pl.pallas_call(
            kernel,
            out_shape=out_shape,
            grid_spec=grid_spec,
            compiler_params=pltpu.CompilerParams(
                dimension_semantics=("parallel",),
                vmem_limit_bytes=vmem_limit,
            ),
        )

    try:
        out, probs_slab = build_call(True)(x_in, w_folded, b_folded)
    except Exception:
        # This jax version rejected single-buffering the constant block; fall
        # back to default (double) buffering — correctness is unaffected.
        out, probs_slab = build_call(False)(x_in, w_folded, b_folded)

    out = out[:B]
    probs = probs_slab[:B].reshape(B, M, C).transpose(1, 0, 2)
    return out, probs


def _reference(x, weights, biases, clamp_min):
    logits = jnp.einsum("bh,mhc->mbc", x, weights) + biases[:, None, :]
    probs = jax.nn.softmax(logits, axis=-1)
    out = jnp.maximum(jnp.mean(probs, axis=0), clamp_min)
    return out, probs


if __name__ == "__main__":
    # small, deterministic setup (2 batch tiles of 8 -> exercises the grid)
    M, B, H, C = 3, 16, 32, 16
    key = jax.random.PRNGKey(0)
    kx, kw, kb = jax.random.split(key, 3)

    x = jax.random.normal(kx, (B, H), dtype=jnp.float32)
    weights = 0.1 * jax.random.normal(kw, (M, H, C), dtype=jnp.float32)
    biases = 0.01 * jax.random.normal(kb, (M, C), dtype=jnp.float32)

    clamp_min = float(jnp.finfo(jnp.float32).tiny)
    ref_out, ref_probs = _reference(x, weights, biases, clamp_min)

    # Default config (f32 operands / f32 probs) -> tight check.
    out, probs = ensemble_forward(x, weights, biases)
    out = jax.block_until_ready(out)
    probs = jax.block_until_ready(probs)
    assert out.shape == (B, C) and probs.shape == (M, B, C)
    # pl.reciprocal(approx=True) on the EUP path -> loosen from bit-exact f32.
    assert jnp.allclose(out, ref_out, atol=2e-3, rtol=2e-3)
    assert jnp.allclose(probs, ref_probs, atol=2e-3, rtol=2e-3)

    # Production config: bf16 matmul operands + bf16 probs writeback.
    out_bf, probs_bf = ensemble_forward(x, weights, biases,
                                        matmul_dtype=jnp.bfloat16,
                                        probs_dtype=jnp.bfloat16)
    out_bf = jax.block_until_ready(out_bf)
    probs_bf = jax.block_until_ready(probs_bf)
    assert jnp.allclose(out_bf, ref_out, atol=2e-2, rtol=2e-2)
    assert jnp.allclose(probs_bf.astype(jnp.float32), ref_probs,
                        atol=3e-2, rtol=3e-2)

    print("KERNEL_OK")
</pallas_src>

<mosaic_0001>
module attributes {stable_mosaic.version = 11 : i64} {
  func.func @_ensemble_kernel(%arg0: i32, %arg1: memref<8x32xf32, #tpu.memory_space<vmem>>, %arg2: memref<32x48xf32, #tpu.memory_space<vmem>>, %arg3: memref<1x48xf32, #tpu.memory_space<vmem>>, %arg4: memref<8x16xf32, #tpu.memory_space<vmem>>, %arg5: memref<8x48xf32, #tpu.memory_space<vmem>>) attributes {dimension_semantics = [#tpu.dimension_semantics<parallel>], iteration_bounds = array<i64: 2>, scalar_prefetch = 0 : i64, scratch_operands = 0 : i64, tpu.core_type = #tpu.core_type<tc>, window_params = [{transform_indices = @transform_0, window_bounds = array<i64: 8, 32>}, {pipeline_mode = #tpu.pipeline_mode<synchronous>, transform_indices = @transform_1, window_bounds = array<i64: 32, 48>}, {pipeline_mode = #tpu.pipeline_mode<synchronous>, transform_indices = @transform_2, window_bounds = array<i64: 1, 48>}, {transform_indices = @transform_3, window_bounds = array<i64: 8, 16>}, {transform_indices = @transform_4, window_bounds = array<i64: 8, 48>}]} {
    %c0 = arith.constant 0 : index
    %c0_0 = arith.constant 0 : index
    %0 = vector.load %arg1[%c0, %c0_0] : memref<8x32xf32, #tpu.memory_space<vmem>>, vector<8x32xf32>
    %c0_1 = arith.constant 0 : index
    %c0_2 = arith.constant 0 : index
    %1 = vector.load %arg2[%c0_1, %c0_2] : memref<32x48xf32, #tpu.memory_space<vmem>>, vector<32x48xf32>
    %cst = arith.constant dense<0.000000e+00> : vector<8x48xf32>
    %2 = tpu.matmul %0, %1, %cst {dimension_numbers = #tpu.dot_dimension_numbers<[1], [0], [0], [1], [0, 0, 1, 1], [], []>} : vector<8x32xf32>, vector<32x48xf32>, vector<8x48xf32> -> vector<8x48xf32>
    %c0_3 = arith.constant 0 : index
    %c0_4 = arith.constant 0 : index
    %3 = vector.load %arg3[%c0_3, %c0_4] : memref<1x48xf32, #tpu.memory_space<vmem>>, vector<1x48xf32>
    %4 = vector.broadcast %3 : vector<1x48xf32> to vector<8x48xf32>
    %5 = arith.addf %2, %4 : vector<8x48xf32>
    %6 = vector.extract_strided_slice %5 {offsets = [0, 0], sizes = [8, 16], strides = [1, 1]} : vector<8x48xf32> to vector<8x16xf32>
    %cst_5 = arith.constant dense<0xFF800000> : vector<8xf32>
    %7 = vector.multi_reduction <maximumf>, %6, %cst_5 [1] : vector<8x16xf32> to vector<8xf32>
    %8 = vector.shape_cast %7 : vector<8xf32> to vector<8x1xf32>
    %9 = vector.broadcast %8 : vector<8x1xf32> to vector<8x16xf32>
    %10 = arith.subf %6, %9 : vector<8x16xf32>
    %11 = math.exp %10 : vector<8x16xf32>
    %cst_6 = arith.constant dense<0.000000e+00> : vector<8xf32>
    %12 = vector.multi_reduction <add>, %11, %cst_6 [1] : vector<8x16xf32> to vector<8xf32>
    %13 = vector.shape_cast %12 : vector<8xf32> to vector<8x1xf32>
    %14 = tpu.reciprocal %13 {approx = true} : vector<8x1xf32> -> vector<8x1xf32>
    %15 = vector.broadcast %14 : vector<8x1xf32> to vector<8x16xf32>
    %16 = arith.mulf %11, %15 : vector<8x16xf32>
    %17 = vector.extract_strided_slice %5 {offsets = [0, 16], sizes = [8, 16], strides = [1, 1]} : vector<8x48xf32> to vector<8x16xf32>
    %cst_7 = arith.constant dense<0xFF800000> : vector<8xf32>
    %18 = vector.multi_reduction <maximumf>, %17, %cst_7 [1] : vector<8x16xf32> to vector<8xf32>
    %19 = vector.shape_cast %18 : vector<8xf32> to vector<8x1xf32>
    %20 = vector.broadcast %19 : vector<8x1xf32> to vector<8x16xf32>
    %21 = arith.subf %17, %20 : vector<8x16xf32>
    %22 = math.exp %21 : vector<8x16xf32>
    %cst_8 = arith.constant dense<0.000000e+00> : vector<8xf32>
    %23 = vector.multi_reduction <add>, %22, %cst_8 [1] : vector<8x16xf32> to vector<8xf32>
    %24 = vector.shape_cast %23 : vector<8xf32> to vector<8x1xf32>
    %25 = tpu.reciprocal %24 {approx = true} : vector<8x1xf32> -> vector<8x1xf32>
    %26 = vector.broadcast %25 : vector<8x1xf32> to vector<8x16xf32>
    %27 = arith.mulf %22, %26 : vector<8x16xf32>
    %28 = arith.addf %16, %27 : vector<8x16xf32>
    %29 = vector.extract_strided_slice %5 {offsets = [0, 32], sizes = [8, 16], strides = [1, 1]} : vector<8x48xf32> to vector<8x16xf32>
    %cst_9 = arith.constant dense<0xFF800000> : vector<8xf32>
    %30 = vector.multi_reduction <maximumf>, %29, %cst_9 [1] : vector<8x16xf32> to vector<8xf32>
    %31 = vector.shape_cast %30 : vector<8xf32> to vector<8x1xf32>
    %32 = vector.broadcast %31 : vector<8x1xf32> to vector<8x16xf32>
    %33 = arith.subf %29, %32 : vector<8x16xf32>
    %34 = math.exp %33 : vector<8x16xf32>
    %cst_10 = arith.constant dense<0.000000e+00> : vector<8xf32>
    %35 = vector.multi_reduction <add>, %34, %cst_10 [1] : vector<8x16xf32> to vector<8xf32>
    %36 = vector.shape_cast %35 : vector<8xf32> to vector<8x1xf32>
    %37 = tpu.reciprocal %36 {approx = true} : vector<8x1xf32> -> vector<8x1xf32>
    %38 = vector.broadcast %37 : vector<8x1xf32> to vector<8x16xf32>
    %39 = arith.mulf %34, %38 : vector<8x16xf32>
    %40 = arith.addf %28, %39 : vector<8x16xf32>
    %41 = tpu.concatenate %16, %27, %39 in 1 : vector<8x16xf32>, vector<8x16xf32>, vector<8x16xf32> -> vector<8x48xf32>
    %c0_11 = arith.constant 0 : index
    %c0_12 = arith.constant 0 : index
    %42 = vector.load %arg5[%c0_11, %c0_12] : memref<8x48xf32, #tpu.memory_space<vmem>>, vector<8x48xf32>
    tpu.vector_store %arg5[%c0_11, %c0_12], %41 {strides = array<i32>} : memref<8x48xf32, #tpu.memory_space<vmem>>, vector<8x48xf32>,
    %cst_13 = arith.constant 0.333333343 : f32
    %43 = vector.broadcast %cst_13 : f32 to vector<8x16xf32>
    %44 = arith.mulf %40, %43 : vector<8x16xf32>
    %cst_14 = arith.constant 1.17549435E-38 : f32
    %45 = vector.broadcast %cst_14 : f32 to vector<8x16xf32>
    %46 = arith.maximumf %44, %45 : vector<8x16xf32>
    %c0_15 = arith.constant 0 : index
    %c0_16 = arith.constant 0 : index
    %47 = vector.load %arg4[%c0_15, %c0_16] : memref<8x16xf32, #tpu.memory_space<vmem>>, vector<8x16xf32>
    tpu.vector_store %arg4[%c0_15, %c0_16], %46 {strides = array<i32>} : memref<8x16xf32, #tpu.memory_space<vmem>>, vector<8x16xf32>,
    return
  }
  func.func @transform_0(%arg0: i32) -> (i32, i32) {
    %c0_i32 = arith.constant 0 : i32
    %c0_i32_0 = arith.constant 0 : i32
    return %arg0, %c0_i32 : i32, i32
  }
  func.func @transform_1(%arg0: i32) -> (i32, i32) {
    %c0_i32 = arith.constant 0 : i32
    %c0_i32_0 = arith.constant 0 : i32
    %c0_i32_1 = arith.constant 0 : i32
    return %c0_i32, %c0_i32_0 : i32, i32
  }
  func.func @transform_2(%arg0: i32) -> (i32, i32) {
    %c0_i32 = arith.constant 0 : i32
    %c0_i32_0 = arith.constant 0 : i32
    %c0_i32_1 = arith.constant 0 : i32
    return %c0_i32, %c0_i32_0 : i32, i32
  }
  func.func @transform_3(%arg0: i32) -> (i32, i32) {
    %c0_i32 = arith.constant 0 : i32
    %c0_i32_0 = arith.constant 0 : i32
    return %arg0, %c0_i32 : i32, i32
  }
  func.func @transform_4(%arg0: i32) -> (i32, i32) {
    %c0_i32 = arith.constant 0 : i32
    %c0_i32_0 = arith.constant 0 : i32
    return %arg0, %c0_i32 : i32, i32
  }
}

module attributes {stable_mosaic.version = 11 : i64} {
  func.func @_ensemble_kernel(%arg0: i32, %arg1: memref<8x32xf32, #tpu.memory_space<vmem>>, %arg2: memref<32x48xf32, #tpu.memory_space<vmem>>, %arg3: memref<1x48xf32, #tpu.memory_space<vmem>>, %arg4: memref<8x16xf32, #tpu.memory_space<vmem>>, %arg5: memref<8x48xf32, #tpu.memory_space<vmem>>) attributes {dimension_semantics = [#tpu.dimension_semantics<parallel>], iteration_bounds = array<i64: 2>, scalar_prefetch = 0 : i64, scratch_operands = 0 : i64, tpu.core_type = #tpu.core_type<tc>, window_params = [{transform_indices = @transform_0, window_bounds = array<i64: 8, 32>}, {pipeline_mode = #tpu.pipeline_mode<synchronous>, transform_indices = @transform_1, window_bounds = array<i64: 32, 48>}, {pipeline_mode = #tpu.pipeline_mode<synchronous>, transform_indices = @transform_2, window_bounds = array<i64: 1, 48>}, {transform_indices = @transform_3, window_bounds = array<i64: 8, 16>}, {transform_indices = @transform_4, window_bounds = array<i64: 8, 48>}]} {
    %c0 = arith.constant 0 : index
    %c0_0 = arith.constant 0 : index
    %0 = vector.load %arg1[%c0, %c0_0] : memref<8x32xf32, #tpu.memory_space<vmem>>, vector<8x32xf32>
    %c0_1 = arith.constant 0 : index
    %c0_2 = arith.constant 0 : index
    %1 = vector.load %arg2[%c0_1, %c0_2] : memref<32x48xf32, #tpu.memory_space<vmem>>, vector<32x48xf32>
    %cst = arith.constant dense<0.000000e+00> : vector<8x48xf32>
    %2 = tpu.matmul %0, %1, %cst {dimension_numbers = #tpu.dot_dimension_numbers<[1], [0], [0], [1], [0, 0, 1, 1], [], []>} : vector<8x32xf32>, vector<32x48xf32>, vector<8x48xf32> -> vector<8x48xf32>
    %c0_3 = arith.constant 0 : index
    %c0_4 = arith.constant 0 : index
    %3 = vector.load %arg3[%c0_3, %c0_4] : memref<1x48xf32, #tpu.memory_space<vmem>>, vector<1x48xf32>
    %4 = vector.broadcast %3 : vector<1x48xf32> to vector<8x48xf32>
    %5 = arith.addf %2, %4 : vector<8x48xf32>
    %6 = vector.extract_strided_slice %5 {offsets = [0, 0], sizes = [8, 16], strides = [1, 1]} : vector<8x48xf32> to vector<8x16xf32>
    %cst_5 = arith.constant dense<0xFF800000> : vector<8xf32>
    %7 = vector.multi_reduction <maximumf>, %6, %cst_5 [1] : vector<8x16xf32> to vector<8xf32>
    %8 = vector.shape_cast %7 : vector<8xf32> to vector<8x1xf32>
    %9 = vector.broadcast %8 : vector<8x1xf32> to vector<8x16xf32>
    %10 = arith.subf %6, %9 : vector<8x16xf32>
    %11 = math.exp %10 : vector<8x16xf32>
    %cst_6 = arith.constant dense<0.000000e+00> : vector<8xf32>
    %12 = vector.multi_reduction <add>, %11, %cst_6 [1] : vector<8x16xf32> to vector<8xf32>
    %13 = vector.shape_cast %12 : vector<8xf32> to vector<8x1xf32>
    %14 = tpu.reciprocal %13 {approx = true} : vector<8x1xf32> -> vector<8x1xf32>
    %15 = vector.broadcast %14 : vector<8x1xf32> to vector<8x16xf32>
    %16 = arith.mulf %11, %15 : vector<8x16xf32>
    %17 = vector.extract_strided_slice %5 {offsets = [0, 16], sizes = [8, 16], strides = [1, 1]} : vector<8x48xf32> to vector<8x16xf32>
    %cst_7 = arith.constant dense<0xFF800000> : vector<8xf32>
    %18 = vector.multi_reduction <maximumf>, %17, %cst_7 [1] : vector<8x16xf32> to vector<8xf32>
    %19 = vector.shape_cast %18 : vector<8xf32> to vector<8x1xf32>
    %20 = vector.broadcast %19 : vector<8x1xf32> to vector<8x16xf32>
    %21 = arith.subf %17, %20 : vector<8x16xf32>
    %22 = math.exp %21 : vector<8x16xf32>
    %cst_8 = arith.constant dense<0.000000e+00> : vector<8xf32>
    %23 = vector.multi_reduction <add>, %22, %cst_8 [1] : vector<8x16xf32> to vector<8xf32>
    %24 = vector.shape_cast %23 : vector<8xf32> to vector<8x1xf32>
    %25 = tpu.reciprocal %24 {approx = true} : vector<8x1xf32> -> vector<8x1xf32>
    %26 = vector.broadcast %25 : vector<8x1xf32> to vector<8x16xf32>
    %27 = arith.mulf %22, %26 : vector<8x16xf32>
    %28 = arith.addf %16, %27 : vector<8x16xf32>
    %29 = vector.extract_strided_slice %5 {offsets = [0, 32], sizes = [8, 16], strides = [1, 1]} : vector<8x48xf32> to vector<8x16xf32>
    %cst_9 = arith.constant dense<0xFF800000> : vector<8xf32>
    %30 = vector.multi_reduction <maximumf>, %29, %cst_9 [1] : vector<8x16xf32> to vector<8xf32>
    %31 = vector.shape_cast %30 : vector<8xf32> to vector<8x1xf32>
    %32 = vector.broadcast %31 : vector<8x1xf32> to vector<8x16xf32>
    %33 = arith.subf %29, %32 : vector<8x16xf32>
    %34 = math.exp %33 : vector<8x16xf32>
    %cst_10 = arith.constant dense<0.000000e+00> : vector<8xf32>
    %35 = vector.multi_reduction <add>, %34, %cst_10 [1] : vector<8x16xf32> to vector<8xf32>
    %36 = vector.shape_cast %35 : vector<8xf32> to vector<8x1xf32>
    %37 = tpu.reciprocal %36 {approx = true} : vector<8x1xf32> -> vector<8x1xf32>
    %38 = vector.broadcast %37 : vector<8x1xf32> to vector<8x16xf32>
    %39 = arith.mulf %34, %38 : vector<8x16xf32>
    %40 = arith.addf %28, %39 : vector<8x16xf32>
    %41 = tpu.concatenate %16, %27, %39 in 1 : vector<8x16xf32>, vector<8x16xf32>, vector<8x16xf32> -> vector<8x48xf32>
    %c0_11 = arith.constant 0 : index
    %c0_12 = arith.constant 0 : index
    %42 = vector.load %arg5[%c0_11, %c0_12] : memref<8x48xf32, #tpu.memory_space<vmem>>, vector<8x48xf32>
    tpu.vector_store %arg5[%c0_11, %c0_12], %41 {strides = array<i32>} : memref<8x48xf32, #tpu.memory_space<vmem>>, vector<8x48xf32>,
    %cst_13 = arith.constant 0.333333343 : f32
    %43 = vector.broadcast %cst_13 : f32 to vector<8x16xf32>
    %44 = arith.mulf %40, %43 : vector<8x16xf32>
    %cst_14 = arith.constant 1.17549435E-38 : f32
    %45 = vector.broadcast %cst_14 : f32 to vector<8x16xf32>
    %46 = arith.maximumf %44, %45 : vector<8x16xf32>
    %c0_15 = arith.constant 0 : index
    %c0_16 = arith.constant 0 : index
    %47 = vector.load %arg4[%c0_15, %c0_16] : memref<8x16xf32, #tpu.memory_space<vmem>>, vector<8x16xf32>
    tpu.vector_store %arg4[%c0_15, %c0_16], %46 {strides = array<i32>} : memref<8x16xf32, #tpu.memory_space<vmem>>, vector<8x16xf32>,
    return
  }
  func.func @transform_0(%arg0: i32) -> (i32, i32) {
    %c0_i32 = arith.constant 0 : i32
    %c0_i32_0 = arith.constant 0 : i32
    return %arg0, %c0_i32 : i32, i32
  }
  func.func @transform_1(%arg0: i32) -> (i32, i32) {
    %c0_i32 = arith.constant 0 : i32
    %c0_i32_0 = arith.constant 0 : i32
    %c0_i32_1 = arith.constant 0 : i32
    return %c0_i32, %c0_i32_0 : i32, i32
  }
  func.func @transform_2(%arg0: i32) -> (i32, i32) {
    %c0_i32 = arith.constant 0 : i32
    %c0_i32_0 = arith.constant 0 : i32
    %c0_i32_1 = arith.constant 0 : i32
    return %c0_i32, %c0_i32_0 : i32, i32
  }
  func.func @transform_3(%arg0: i32) -> (i32, i32) {
    %c0_i32 = arith.constant 0 : i32
    %c0_i32_0 = arith.constant 0 : i32
    return %arg0, %c0_i32 : i32, i32
  }
  func.func @transform_4(%arg0: i32) -> (i32, i32) {
    %c0_i32 = arith.constant 0 : i32
    %c0_i32_0 = arith.constant 0 : i32
    return %arg0, %c0_i32 : i32, i32
  }
}

</mosaic_0001>

<llo_original>
// kernel: tpu_custom_call.1
$region0: #{tpu_custom_call.1}
  #allocation0 [shape = 'u32[]', space=smem, size = 0x4, offset = 0x4, fixed_abs, tag = 'smem constant byte address 0x4 - core index']
  #allocation1 [shape = 'u32[144,128]{1,0:T(1,128)}', space=vmem, size = 0x12000, scoped, tag = 'internal scratch']
  %s0 = inlined_call_operand.hbm [shape: f32[16,32], index: 0, kind: input, shape index: {}]
  %s1 = inlined_call_operand.hbm [shape: f32[32,48], index: 1, kind: input, shape index: {}]
  %s2 = inlined_call_operand.vmem [shape: f32[1,48], index: 2, kind: input, shape index: {}]
  %s3 = inlined_call_operand.hbm [shape: f32[16,16], index: 3, kind: output, shape index: {0}]
  %s4 = inlined_call_operand.hbm [shape: f32[16,48], index: 4, kind: output, shape index: {1}]
  %5 = xla_tuple %s3, %s4
  %s6 = sld [smem:[#allocation0]]
  $region61: #{tpu_custom_call.1} parent=0
    _
  %s8 = ssub.s32 1, %s6
  %s9 = scalar_select 0, %s8, %s6
  $region1: #{tpu_custom_call.1} parent=0
    #allocation2 [shape = 'u8[8192]{0}', space=vmem, size = 0x2000, scoped, tag = 'input window, operand 0']
    #allocation3 [shape = 's32[2]{0}', space=sflag, size = 0x8, scoped, tag = 'scoped memory for tpu_custom_call.1']
    #allocation4 [shape = 's32[2]{0}', space=sflag, size = 0x8, scoped, tag = 'scoped memory for tpu_custom_call.1']
    #allocation5 [shape = 'u8[16384]{0}', space=vmem, size = 0x4000, scoped, tag = 'input window, operand 1, single buffered']
    #allocation6 [shape = 's32[1]{0}', space=sflag, size = 0x4, scoped, tag = 'scoped memory for tpu_custom_call.1']
    #allocation7 [shape = 'u8[8192]{0}', space=vmem, size = 0x2000, scoped, tag = 'output window, operand 0']
    #allocation8 [shape = 'u8[8192]{0}', space=vmem, size = 0x2000, scoped, tag = 'output window, operand 1']
    #allocation9 [shape = 's32[2]{0}', space=sflag, size = 0x8, scoped, tag = 'scoped memory for tpu_custom_call.1']
    %10 = vsyncpa [#allocation3], 0
    %s11 = scalar_lea.sflag [#allocation3], 1
    %12 = vsyncpa %s11, 0
    %13 = vsyncpa [#allocation6], 0
    %14 = vsyncpa [#allocation4], 0
    %s15 = scalar_lea.sflag [#allocation4], 1
    %16 = vsyncpa %s15, 0
    %17 = vsyncpa [#allocation9], 0
    %s18 = scalar_lea.sflag [#allocation9], 1
    %19 = vsyncpa %s18, 0
    loop: start=0, step=1, limit=4
    $region2: #{tpu_custom_call.1} parent=1 // loop_pre_header
      _
    $region3: #{tpu_custom_call.1} parent=1 // loop_header
      %s21 = sphi 0, %s25
      %p22 = scmp.ge.s32.totalorder %s21, 4
      %s31 = sphi 0, %s33
      %s34 = sphi 0, %s31
      %s35 = sphi 0, %s34
      %s51 = sphi 0, %s35
      %s55 = sphi 0, %s55
      %s57 = sphi 0, %s55
      %s58 = sphi 0, %s57
      %s72 = sphi 0, %s58
      %s76 = sphi 0, %s76
      %s78 = sphi 0, %s76
      %s79 = sphi 0, %s78
      %s93 = sphi 0, %s79
      %s99 = sphi 0, %s101
      %s102 = sphi 0, %s99
      %s103 = sphi 0, %s102
      %s119 = sphi 0, %s103
      %s125 = sphi 0, %s127
      %s128 = sphi 0, %s125
      %s129 = sphi 0, %s128
      %s145 = sphi 0, %s129
    $region4: #{tpu_custom_call.1} parent=1 // loop_header_branch
      %24 = sbr.rel (%p22) target = $region8
    $region5: #{tpu_custom_call.1} parent=1 // loop_body
      %s26 = ssub.s32 %s21, 1
      %s27 = ssub.s32 %s21, 2
      %s28 = sadd.s32 %s21, 1
      %s29 = ssub.s32 %s21, %s28
      %p30 = scmp.eq.s32.totalorder %s29, 0
      %s32 = sadd.s32 %s31, 1
      %s33 = scalar_select %p30, %s31, %s32
      %p36 = pneg %p30
      %p37 = scmp.eq.s32.totalorder %s21, 1
      %p38 = por %p36, %p37
      %p39 = scmp.ne.s32.totalorder %s31, %s34
      %p40 = scmp.eq.s32.totalorder %s21, 0
      %p41 = por %p39, %p40
      %p42 = scmp.ne.s32.totalorder %s31, %s34
      %p43 = scmp.eq.s32.totalorder %s26, 1
      %p44 = por %p42, %p43
      %p45 = scmp.ne.s32.totalorder %s34, %s35
      %p46 = scmp.eq.s32.totalorder %s26, 0
      %p47 = por %p45, %p46
      %p48 = scmp.ne.s32.totalorder %s34, %s35
      %p49 = scmp.eq.s32.totalorder %s27, 1
      %p50 = por %p48, %p49
      %p52 = scmp.ne.s32.totalorder %s35, %s51
      %p53 = scmp.eq.s32.totalorder %s27, 0
      %p54 = por %p52, %p53
      %s56 = sadd.s32 %s55, 1
      %p59 = scmp.eq.s32.totalorder %s21, 1
      %p60 = scmp.ne.s32.totalorder %s55, %s57
      %p61 = scmp.eq.s32.totalorder %s21, 0
      %p62 = por %p60, %p61
      %p63 = scmp.ne.s32.totalorder %s55, %s57
      %p64 = scmp.eq.s32.totalorder %s26, 1
      %p65 = por %p63, %p64
      %p66 = scmp.ne.s32.totalorder %s57, %s58
      %p67 = scmp.eq.s32.totalorder %s26, 0
      %p68 = por %p66, %p67
      %p69 = scmp.ne.s32.totalorder %s57, %s58
      %p70 = scmp.eq.s32.totalorder %s27, 1
      %p71 = por %p69, %p70
      %p73 = scmp.ne.s32.totalorder %s58, %s72
      %p74 = scmp.eq.s32.totalorder %s27, 0
      %p75 = por %p73, %p74
      %s77 = sadd.s32 %s76, 1
      %p80 = scmp.eq.s32.totalorder %s21, 1
      %p81 = scmp.ne.s32.totalorder %s76, %s78
      %p82 = scmp.eq.s32.totalorder %s21, 0
      %p83 = por %p81, %p82
      %p84 = scmp.ne.s32.totalorder %s76, %s78
      %p85 = scmp.eq.s32.totalorder %s26, 1
      %p86 = por %p84, %p85
      %p87 = scmp.ne.s32.totalorder %s78, %s79
      %p88 = scmp.eq.s32.totalorder %s26, 0
      %p89 = por %p87, %p88
      %p90 = scmp.ne.s32.totalorder %s78, %s79
      %p91 = scmp.eq.s32.totalorder %s27, 1
      %p92 = por %p90, %p91
      %p94 = scmp.ne.s32.totalorder %s79, %s93
      %p95 = scmp.eq.s32.totalorder %s27, 0
      %p96 = por %p94, %p95
      %s97 = ssub.s32 %s21, %s28
      %p98 = scmp.eq.s32.totalorder %s97, 0
      %s100 = sadd.s32 %s99, 1
      %s101 = scalar_select %p98, %s99, %s100
      %p104 = pneg %p98
      %p105 = scmp.eq.s32.totalorder %s21, 1
      %p106 = por %p104, %p105
      %p107 = scmp.ne.s32.totalorder %s99, %s102
      %p108 = scmp.eq.s32.totalorder %s21, 0
      %p109 = por %p107, %p108
      %p110 = scmp.ne.s32.totalorder %s99, %s102
      %p111 = scmp.eq.s32.totalorder %s26, 1
      %p112 = por %p110, %p111
      %p113 = scmp.ne.s32.totalorder %s102, %s103
      %p114 = scmp.eq.s32.totalorder %s26, 0
      %p115 = por %p113, %p114
      %p116 = scmp.ne.s32.totalorder %s102, %s103
      %p117 = scmp.eq.s32.totalorder %s27, 1
      %p118 = por %p116, %p117
      %p120 = scmp.ne.s32.totalorder %s103, %s119
      %p121 = scmp.eq.s32.totalorder %s27, 0
      %p122 = por %p120, %p121
      %s123 = ssub.s32 %s21, %s28
      %p124 = scmp.eq.s32.totalorder %s123, 0
      %s126 = sadd.s32 %s125, 1
      %s127 = scalar_select %p124, %s125, %s126
      %p130 = pneg %p124
      %p131 = scmp.eq.s32.totalorder %s21, 1
      %p132 = por %p130, %p131
      %p133 = scmp.ne.s32.totalorder %s125, %s128
      %p134 = scmp.eq.s32.totalorder %s21, 0
      %p135 = por %p133, %p134
      %p136 = scmp.ne.s32.totalorder %s125, %s128
      %p137 = scmp.eq.s32.totalorder %s26, 1
      %p138 = por %p136, %p137
      %p139 = scmp.ne.s32.totalorder %s128, %s129
      %p140 = scmp.eq.s32.totalorder %s26, 0
      %p141 = por %p139, %p140
      %p142 = scmp.ne.s32.totalorder %s128, %s129
      %p143 = scmp.eq.s32.totalorder %s27, 1
      %p144 = por %p142, %p143
      %p146 = scmp.ne.s32.totalorder %s129, %s145
      %p147 = scmp.eq.s32.totalorder %s27, 0
      %p148 = por %p146, %p147
      %p149 = scmp.le.s32.totalorder 1, %s21
      %p150 = scmp.lt.s32.totalorder %s21, 3
      %p151 = pnand %p149, %p150
      %p152 = pneg %p151
      // Predicated region
      $region9: #{tpu_custom_call.1} parent=5 // pred_check
        _
      $region10: #{tpu_custom_call.1} parent=5 // pred_check_branch
        %154 = sbr.rel (%p151) target = $region12
      $region11: #{tpu_custom_call.1} parent=5 // pred_region
        %s155 = ssub.s32 %s21, 1
        // Predicated region
        $region13: #{tpu_custom_call.1} parent=11 // pred_check
          %p156 = pneg %p68
        $region14: #{tpu_custom_call.1} parent=11 // pred_check_branch
          %158 = sbr.rel (%p156) target = $region16
        $region15: #{tpu_custom_call.1} parent=11 // pred_region
          %s160 = ssub.s32 512, 512
          %161 = vsyncadd [#allocation6], %s160
          %s162 = sshll.u32 [#allocation5], 4
          %s163 = int_to_ptr.vmem [resolvable:$true] %s162
          %168 = dma.hbm_to_vmem [thread:$0]  %s1, 512, %s163, [#allocation6], 128, 128, 8
        $region16: #{tpu_custom_call.1} parent=11 // pred_fallthru
          _
        // Predicated region
        $region17: #{tpu_custom_call.1} parent=11 // pred_check
          %p169 = pneg %p89
        $region18: #{tpu_custom_call.1} parent=11 // pred_check_branch
          %171 = sbr.rel (%p169) target = $region20
        $region19: #{tpu_custom_call.1} parent=11 // pred_region
          _
        $region20: #{tpu_custom_call.1} parent=11 // pred_fallthru
          _
      $region12: #{tpu_custom_call.1} parent=5 // pred_fallthru
        _
      %p172 = scmp.lt.s32.totalorder %s21, 2
      // Predicated region
      $region21: #{tpu_custom_call.1} parent=5 // pred_check
        %p173 = pneg %p172
      $region22: #{tpu_custom_call.1} parent=5 // pred_check_branch
        %175 = sbr.rel (%p173) target = $region24
      $region23: #{tpu_custom_call.1} parent=5 // pred_region
        // Predicated region
        $region25: #{tpu_custom_call.1} parent=23 // pred_check
          %p176 = pneg %p41
        $region26: #{tpu_custom_call.1} parent=23 // pred_check_branch
          %178 = sbr.rel (%p176) target = $region28
        $region27: #{tpu_custom_call.1} parent=23 // pred_region
          %s179 = sand.u32 %s31, 1
          %s180 = scalar_lea.sflag [#allocation3], %s179
          %s181 = sand.u32 %s31, 1
          %s182 = smul.addr %s181, 8
          %s183 = scalar_lea.vmem [#allocation2], %s182
          %s185 = ssub.s32 128, 128
          %186 = vsyncadd %s180, %s185
          %s187 = smul.addr %s21, 128
          %s188 = scalar_lea.hbm %s0, %s187
          %s190 = sshll.u32 %s183, 4
          %s191 = int_to_ptr.vmem [resolvable:$true] %s190
          %193 = dma.hbm_to_vmem [thread:$0]  %s188, 128, %s191, %s180
        $region28: #{tpu_custom_call.1} parent=23 // pred_fallthru
          _
      $region24: #{tpu_custom_call.1} parent=5 // pred_fallthru
        _
      %p194 = scmp.le.s32.totalorder 1, %s21
      %p195 = scmp.lt.s32.totalorder %s21, 3
      %p196 = pnand %p194, %p195
      %p197 = pneg %p196
      // Predicated region
      $region29: #{tpu_custom_call.1} parent=5 // pred_check
        _
      $region30: #{tpu_custom_call.1} parent=5 // pred_check_branch
        %199 = sbr.rel (%p196) target = $region32
      $region31: #{tpu_custom_call.1} parent=5 // pred_region
        %s200 = ssub.s32 %s21, 1
        %s201 = sand.u32 %s34, 1
        %s202 = scalar_lea.sflag [#allocation3], %s201
        %s203 = sand.u32 %s34, 1
        %s204 = smul.addr %s203, 8
        %s205 = scalar_lea.vmem [#allocation2], %s204
        // Predicated region
        $region33: #{tpu_custom_call.1} parent=31 // pred_check
          %p206 = pneg %p47
        $region34: #{tpu_custom_call.1} parent=31 // pred_check_branch
          %208 = sbr.rel (%p206) target = $region36
        $region35: #{tpu_custom_call.1} parent=31 // pred_region
          %209 = dma.done %s202, 128
        $region36: #{tpu_custom_call.1} parent=31 // pred_fallthru
          _
        // Predicated region
        $region37: #{tpu_custom_call.1} parent=31 // pred_check
          %p210 = pneg %p68
        $region38: #{tpu_custom_call.1} parent=31 // pred_check_branch
          %212 = sbr.rel (%p210) target = $region40
        $region39: #{tpu_custom_call.1} parent=31 // pred_region
          %213 = dma.done [#allocation6], 512
        $region40: #{tpu_custom_call.1} parent=31 // pred_fallthru
          _
        %s214 = sand.u32 %s34, 1
        %s215 = scalar_lea.sflag [#allocation3], %s214
        %s216 = sand.u32 %s34, 1
        %s217 = smul.addr %s216, 8
        %s218 = scalar_lea.vmem [#allocation2], %s217
        %p219 = pneg %p47
        %p220 = pneg %p44
        %p221 = pneg %p68
        %p222 = pneg %p65
        %p223 = pneg %p89
        %p224 = pneg %p86
        %p225 = pneg %p115
        %p226 = pneg %p112
        %s227 = sand.u32 %s102, 1
        %s228 = scalar_lea.sflag [#allocation4], %s227
        %s229 = sand.u32 %s102, 1
        %s230 = smul.addr %s229, 8
        %s231 = scalar_lea.vmem [#allocation7], %s230
        %p232 = pneg %p141
        %p233 = pneg %p138
        %s234 = sand.u32 %s128, 1
        %s235 = scalar_lea.sflag [#allocation9], %s234
        %s236 = sand.u32 %s128, 1
        %s237 = smul.addr %s236, 8
        %s238 = scalar_lea.vmem [#allocation8], %s237
        %v239 = vld [vmem:[%s205] sm:$0xff]
        %v240 = vld [vmem:[#allocation5] sm:$0xff]
        %v241 = vld [vmem:[#allocation5 + $0x8] sm:$0xff]
        %v242 = vld [vmem:[#allocation5 + $0x10] sm:$0xff]
        %v243 = vld [vmem:[#allocation5 + $0x18] sm:$0xff]
        %v244 = vld [vmem:[%s2] sm:$0x1]
        %v246 = vlaneseq
        %v247 = vshrl.u32 %v246, 7
        %v248 = vsub.s32 0, %v247
        %v249 = vrot.slane %v244, %v248
        %vm251 = vcmask 261120
        %v253 = vsel %vm251, %v239, 0
        %255 = vmatprep.subr.mxu0 0.0
        %256 = vmatpush1.msra.mxu0 0.0
        %257 = vmatprep.subr.mxu0 0.0
        %258 = vmatpush1.msra.mxu0 0.0
        %259 = vmatprep.subr.mxu0 0.0
        %260 = vmatpush1.msra.mxu0 0.0
        %261 = vmatprep.subr.mxu0 0.0
        %262 = vmatpush1.msra.mxu0 0.0
        %263 = vmatprep.subr.mxu0 0.0
        %264 = vmatpush1.msra.mxu0 0.0
        %265 = vmatprep.subr.mxu0 0.0
        %266 = vmatpush1.msra.mxu0 0.0
        %267 = vmatprep.subr.mxu0 0.0
        %268 = vmatpush1.msra.mxu0 0.0
        %269 = vmatprep.subr.mxu0 0.0
        %270 = vmatpush1.msra.mxu0 0.0
        %271 = vmatprep.subr.mxu0 0.0
        %272 = vmatpush1.msra.mxu0 0.0
        %273 = vmatprep.subr.mxu0 0.0
        %274 = vmatpush1.msra.mxu0 0.0
        %275 = vmatprep.subr.mxu0 0.0
        %276 = vmatpush1.msra.mxu0 0.0
        %277 = vmatprep.subr.mxu0 0.0
        %278 = vmatpush1.msra.mxu0 0.0
        %279 = vmatprep.subr.mxu0 0.0
        %280 = vmatpush1.msra.mxu0 %v243
        %281 = vmatprep.subr.mxu0 0.0
        %282 = vmatpush1.msra.mxu0 %v242
        %283 = vmatprep.subr.mxu0 0.0
        %284 = vmatpush1.msra.mxu0 %v241
        %285 = vmatprep.subr.mxu0 0.0
        %286 = vmatpush1.msra.mxu0 %v240
        %287 = vmatprep.subr.mxu0 0.0
        %288 = vmatpush2.msra.mxu0 0.0
        %289 = vmatprep.subr.mxu0 0.0
        %290 = vmatpush2.msra.mxu0 0.0
        %291 = vmatprep.subr.mxu0 0.0
        %292 = vmatpush2.msra.mxu0 0.0
        %293 = vmatprep.subr.mxu0 0.0
        %294 = vmatpush2.msra.mxu0 0.0
        %295 = vmatprep.subr.mxu0 0.0
        %296 = vmatpush2.msra.mxu0 0.0
        %297 = vmatprep.subr.mxu0 0.0
        %298 = vmatpush2.msra.mxu0 0.0
        %299 = vmatprep.subr.mxu0 0.0
        %300 = vmatpush2.msra.mxu0 0.0
        %301 = vmatprep.subr.mxu0 0.0
        %302 = vmatpush2.msra.mxu0 0.0
        %303 = vmatprep.subr.mxu0 0.0
        %304 = vmatpush2.msra.mxu0 0.0
        %305 = vmatprep.subr.mxu0 0.0
        %306 = vmatpush2.msra.mxu0 0.0
        %307 = vmatprep.subr.mxu0 0.0
        %308 = vmatpush2.msra.mxu0 0.0
        %309 = vmatprep.subr.mxu0 0.0
        %310 = vmatpush2.msra.mxu0 0.0
        %311 = vmatprep.subr.mxu0 0.0
        %312 = vmatpush2.msra.mxu0 0.0
        %313 = vmatprep.subr.mxu0 0.0
        %314 = vmatpush2.msra.mxu0 0.0
        %315 = vmatprep.subr.mxu0 0.0
        %316 = vmatpush2.msra.mxu0 0.0
        %317 = vmatprep.subr.mxu0 0.0
        %318 = vmatpush2.msra.mxu0 0.0
        %319 = vmatprep.mubr.f32.mxu0 0.0
        %320 = vmatmul.mubr.f32.gmra.mxu0 %v253
        %v321 = vpop.f32.mrf.mxu0
        %v322 = vadd.f32 %v249, %v321
        %v323 = vpop.f32.mrf.mxu0
        %324 = vdwg.mxu0
        %vm325 = vcmask 130048
        %v326 = vsel %vm325, %v322, -inf
        %327 = vmax.xlane.f32.xlu0 %v326
        %v328 = vpop.xlane.xlu0 %327
        %v329 = vsub.f32 %v322, %v328
        %v330 = vmul.f32 %v329, 1.442695
        %v331 = vpow.pop %v330
        %v332 = vsel %vm325, %v331, 0.0
        %333 = vadd.xlane.f32.xlu0 %v332
        %v334 = vpop.xlane.xlu0 %333
        %v335 = vrcp.pop %v334
        %v336 = vmul.f32 %v331, %v335
        %vm337 = vcmask 261248
        %v338 = vsel %vm337, %v322, -inf
        %339 = vmax.xlane.f32.xlu0 %v338
        %v340 = vpop.xlane.xlu0 %339
        %v341 = vsub.f32 %v322, %v340
        %v342 = vmul.f32 %v341, 1.442695
        %v343 = vpow.pop %v342
        %345 = vrot.lane.b32.xlu0 %v343, 112
        %v346 = vpop.permute.xlu0 %345
        %v348 = vsel %vm325, %v346, 0.0
        %349 = vadd.xlane.f32.xlu0 %v348
        %v350 = vpop.xlane.xlu0 %349
        %v351 = vrcp.pop %v350
        %v352 = vmul.f32 %v343, %v351
        %354 = vrot.lane.b32.xlu0 %v352, 112
        %v355 = vpop.permute.xlu0 %354
        %v357 = vadd.f32 %v336, %v355
        %vm358 = vcmask 392448
        %v359 = vsel %vm358, %v322, -inf
        %360 = vmax.xlane.f32.xlu0 %v359
        %v361 = vpop.xlane.xlu0 %360
        %v362 = vsub.f32 %v322, %v361
        %v363 = vmul.f32 %v362, 1.442695
        %v364 = vpow.pop %v363
        %366 = vrot.lane.b32.xlu0 %v364, 96
        %v367 = vpop.permute.xlu0 %366
        %v369 = vsel %vm325, %v367, 0.0
        %370 = vadd.xlane.f32.xlu0 %v369
        %v371 = vpop.xlane.xlu0 %370
        %v372 = vrcp.pop %v371
        %v373 = vmul.f32 %v364, %v372
        %375 = vrot.lane.b32.xlu0 %v373, 96
        %v376 = vpop.permute.xlu0 %375
        %v378 = vadd.f32 %v357, %v376
        %v379 = vsel %vm325, %v336, %v352
        %v380 = vsel %vm251, %v379, %v373
        %vm381 = vcmask 392192
        %382 = vst.msk [vmem:[%s238] sm:$0xff] %vm381, %v380
        %v383 = vmul.f32 %v378, 0.33333334
        %v384 = vmax.f32 %v383, 1.1754944e-38
        %385 = vst.msk [vmem:[%s231] sm:$0xff] %vm325, %v384
        %s386 = sand.u32 %s102, 1
        %s387 = scalar_lea.sflag [#allocation4], %s386
        %s388 = sand.u32 %s102, 1
        %s389 = smul.addr %s388, 8
        %s390 = scalar_lea.vmem [#allocation7], %s389
        %s391 = sand.u32 %s128, 1
        %s392 = scalar_lea.sflag [#allocation9], %s391
        %s393 = sand.u32 %s128, 1
        %s394 = smul.addr %s393, 8
        %s395 = scalar_lea.vmem [#allocation8], %s394
        // Predicated region
        $region41: #{tpu_custom_call.1} parent=31 // pred_check
          %p396 = pneg %p112
        $region42: #{tpu_custom_call.1} parent=31 // pred_check_branch
          %398 = sbr.rel (%p396) target = $region44
        $region43: #{tpu_custom_call.1} parent=31 // pred_region
          %s400 = ssub.s32 128, 128
          %401 = vsyncadd %s387, %s400
          %s402 = smul.addr %s26, 128
          %s403 = scalar_lea.hbm %s3, %s402
          %s405 = sshll.u32 %s390, 4
          %s406 = int_to_ptr.vmem [resolvable:$true] %s405
          %408 = dma.vmem_to_hbm [thread:$0]  %s406, 128, %s403, %s387
        $region44: #{tpu_custom_call.1} parent=31 // pred_fallthru
          _
        // Predicated region
        $region45: #{tpu_custom_call.1} parent=31 // pred_check
          %p409 = pneg %p138
        $region46: #{tpu_custom_call.1} parent=31 // pred_check_branch
          %411 = sbr.rel (%p409) target = $region48
        $region47: #{tpu_custom_call.1} parent=31 // pred_region
          %s413 = ssub.s32 128, 128
          %414 = vsyncadd %s392, %s413
          %s415 = smul.addr %s26, 128
          %s416 = scalar_lea.hbm %s4, %s415
          %s418 = sshll.u32 %s395, 4
          %s419 = int_to_ptr.vmem [resolvable:$true] %s418
          %421 = dma.vmem_to_hbm [thread:$0]  %s419, 128, %s416, %s392
        $region48: #{tpu_custom_call.1} parent=31 // pred_fallthru
          _
      $region32: #{tpu_custom_call.1} parent=5 // pred_fallthru
        _
      %p422 = scmp.le.s32.totalorder 2, %s21
      // Predicated region
      $region49: #{tpu_custom_call.1} parent=5 // pred_check
        %p423 = pneg %p422
      $region50: #{tpu_custom_call.1} parent=5 // pred_check_branch
        %425 = sbr.rel (%p423) target = $region52
      $region51: #{tpu_custom_call.1} parent=5 // pred_region
        %s426 = ssub.s32 %s21, 2
        // Predicated region
        $region53: #{tpu_custom_call.1} parent=51 // pred_check
          %p427 = pneg %p118
        $region54: #{tpu_custom_call.1} parent=51 // pred_check_branch
          %429 = sbr.rel (%p427) target = $region56
        $region55: #{tpu_custom_call.1} parent=51 // pred_region
          %s430 = sand.u32 %s103, 1
          %s431 = scalar_lea.sflag [#allocation4], %s430
          %s432 = sand.u32 %s103, 1
          %s433 = smul.addr %s432, 8
          %s434 = scalar_lea.vmem [#allocation7], %s433
          %435 = dma.done %s431, 128
        $region56: #{tpu_custom_call.1} parent=51 // pred_fallthru
          _
        // Predicated region
        $region57: #{tpu_custom_call.1} parent=51 // pred_check
          %p436 = pneg %p144
        $region58: #{tpu_custom_call.1} parent=51 // pred_check_branch
          %438 = sbr.rel (%p436) target = $region60
        $region59: #{tpu_custom_call.1} parent=51 // pred_region
          %s439 = sand.u32 %s129, 1
          %s440 = scalar_lea.sflag [#allocation9], %s439
          %s441 = sand.u32 %s129, 1
          %s442 = smul.addr %s441, 8
          %s443 = scalar_lea.vmem [#allocation8], %s442
          %444 = dma.done %s440, 128
        $region60: #{tpu_custom_call.1} parent=51 // pred_fallthru
          _
      $region52: #{tpu_custom_call.1} parent=5 // pred_fallthru
        _
    $region6: #{tpu_custom_call.1} parent=1 // loop_footer
      %s25 = sadd.s32 1, %s21
    $region7: #{tpu_custom_call.1} parent=1 // loop_footer_branch
      %20 = sbr.rel target = $region3
    $region8: #{tpu_custom_call.1} parent=1 // loop_exit
      _
    %445 = vsyncpa [#allocation3], 1
    %s446 = scalar_lea.sflag [#allocation3], 1
    %447 = vsyncpa %s446, 1
    %448 = vsyncpa [#allocation6], 1
    %449 = vsyncpa [#allocation4], 1
    %s450 = scalar_lea.sflag [#allocation4], 1
    %451 = vsyncpa %s450, 1
    %452 = vsyncpa [#allocation9], 1
    %s453 = scalar_lea.sflag [#allocation9], 1
    %454 = vsyncpa %s453, 1

// kernel: tpu_custom_call.1
$region0: #{tpu_custom_call.1}
  #allocation0 [shape = 'u32[]', space=smem, size = 0x4, offset = 0x4, fixed_abs, tag = 'smem constant byte address 0x4 - core index']
  #allocation1 [shape = 'u32[144,128]{1,0:T(1,128)}', space=vmem, size = 0x12000, scoped, tag = 'internal scratch']
  %s0 = inlined_call_operand.hbm [shape: f32[16,32], index: 0, kind: input, shape index: {}]
  %s1 = inlined_call_operand.hbm [shape: f32[32,48], index: 1, kind: input, shape index: {}]
  %s2 = inlined_call_operand.vmem [shape: f32[1,48], index: 2, kind: input, shape index: {}]
  %s3 = inlined_call_operand.hbm [shape: f32[16,16], index: 3, kind: output, shape index: {0}]
  %s4 = inlined_call_operand.hbm [shape: f32[16,48], index: 4, kind: output, shape index: {1}]
  %5 = xla_tuple %s3, %s4
  %s6 = sld [smem:[#allocation0]]
  $region61: #{tpu_custom_call.1} parent=0
    _
  %s8 = ssub.s32 1, %s6
  %s9 = scalar_select 0, %s8, %s6
  $region1: #{tpu_custom_call.1} parent=0
    #allocation2 [shape = 'u8[8192]{0}', space=vmem, size = 0x2000, scoped, tag = 'input window, operand 0']
    #allocation3 [shape = 's32[2]{0}', space=sflag, size = 0x8, scoped, tag = 'scoped memory for tpu_custom_call.1']
    #allocation4 [shape = 's32[2]{0}', space=sflag, size = 0x8, scoped, tag = 'scoped memory for tpu_custom_call.1']
    #allocation5 [shape = 'u8[16384]{0}', space=vmem, size = 0x4000, scoped, tag = 'input window, operand 1, single buffered']
    #allocation6 [shape = 's32[1]{0}', space=sflag, size = 0x4, scoped, tag = 'scoped memory for tpu_custom_call.1']
    #allocation7 [shape = 'u8[8192]{0}', space=vmem, size = 0x2000, scoped, tag = 'output window, operand 0']
    #allocation8 [shape = 'u8[8192]{0}', space=vmem, size = 0x2000, scoped, tag = 'output window, operand 1']
    #allocation9 [shape = 's32[2]{0}', space=sflag, size = 0x8, scoped, tag = 'scoped memory for tpu_custom_call.1']
    %10 = vsyncpa [#allocation3], 0
    %s11 = scalar_lea.sflag [#allocation3], 1
    %12 = vsyncpa %s11, 0
    %13 = vsyncpa [#allocation6], 0
    %14 = vsyncpa [#allocation4], 0
    %s15 = scalar_lea.sflag [#allocation4], 1
    %16 = vsyncpa %s15, 0
    %17 = vsyncpa [#allocation9], 0
    %s18 = scalar_lea.sflag [#allocation9], 1
    %19 = vsyncpa %s18, 0
    loop: start=0, step=1, limit=4
    $region2: #{tpu_custom_call.1} parent=1 // loop_pre_header
      _
    $region3: #{tpu_custom_call.1} parent=1 // loop_header
      %s21 = sphi 0, %s25
      %p22 = scmp.ge.s32.totalorder %s21, 4
      %s31 = sphi 0, %s33
      %s34 = sphi 0, %s31
      %s35 = sphi 0, %s34
      %s51 = sphi 0, %s35
      %s55 = sphi 0, %s55
      %s57 = sphi 0, %s55
      %s58 = sphi 0, %s57
      %s72 = sphi 0, %s58
      %s76 = sphi 0, %s76
      %s78 = sphi 0, %s76
      %s79 = sphi 0, %s78
      %s93 = sphi 0, %s79
      %s99 = sphi 0, %s101
      %s102 = sphi 0, %s99
      %s103 = sphi 0, %s102
      %s119 = sphi 0, %s103
      %s125 = sphi 0, %s127
      %s128 = sphi 0, %s125
      %s129 = sphi 0, %s128
      %s145 = sphi 0, %s129
    $region4: #{tpu_custom_call.1} parent=1 // loop_header_branch
      %24 = sbr.rel (%p22) target = $region8
    $region5: #{tpu_custom_call.1} parent=1 // loop_body
      %s26 = ssub.s32 %s21, 1
      %s27 = ssub.s32 %s21, 2
      %s28 = sadd.s32 %s21, 1
      %s29 = ssub.s32 %s21, %s28
      %p30 = scmp.eq.s32.totalorder %s29, 0
      %s32 = sadd.s32 %s31, 1
      %s33 = scalar_select %p30, %s31, %s32
      %p36 = pneg %p30
      %p37 = scmp.eq.s32.totalorder %s21, 1
      %p38 = por %p36, %p37
      %p39 = scmp.ne.s32.totalorder %s31, %s34
      %p40 = scmp.eq.s32.totalorder %s21, 0
      %p41 = por %p39, %p40
      %p42 = scmp.ne.s32.totalorder %s31, %s34
      %p43 = scmp.eq.s32.totalorder %s26, 1
      %p44 = por %p42, %p43
      %p45 = scmp.ne.s32.totalorder %s34, %s35
      %p46 = scmp.eq.s32.totalorder %s26, 0
      %p47 = por %p45, %p46
      %p48 = scmp.ne.s32.totalorder %s34, %s35
      %p49 = scmp.eq.s32.totalorder %s27, 1
      %p50 = por %p48, %p49
      %p52 = scmp.ne.s32.totalorder %s35, %s51
      %p53 = scmp.eq.s32.totalorder %s27, 0
      %p54 = por %p52, %p53
      %s56 = sadd.s32 %s55, 1
      %p59 = scmp.eq.s32.totalorder %s21, 1
      %p60 = scmp.ne.s32.totalorder %s55, %s57
      %p61 = scmp.eq.s32.totalorder %s21, 0
      %p62 = por %p60, %p61
      %p63 = scmp.ne.s32.totalorder %s55, %s57
      %p64 = scmp.eq.s32.totalorder %s26, 1
      %p65 = por %p63, %p64
      %p66 = scmp.ne.s32.totalorder %s57, %s58
      %p67 = scmp.eq.s32.totalorder %s26, 0
      %p68 = por %p66, %p67
      %p69 = scmp.ne.s32.totalorder %s57, %s58
      %p70 = scmp.eq.s32.totalorder %s27, 1
      %p71 = por %p69, %p70
      %p73 = scmp.ne.s32.totalorder %s58, %s72
      %p74 = scmp.eq.s32.totalorder %s27, 0
      %p75 = por %p73, %p74
      %s77 = sadd.s32 %s76, 1
      %p80 = scmp.eq.s32.totalorder %s21, 1
      %p81 = scmp.ne.s32.totalorder %s76, %s78
      %p82 = scmp.eq.s32.totalorder %s21, 0
      %p83 = por %p81, %p82
      %p84 = scmp.ne.s32.totalorder %s76, %s78
      %p85 = scmp.eq.s32.totalorder %s26, 1
      %p86 = por %p84, %p85
      %p87 = scmp.ne.s32.totalorder %s78, %s79
      %p88 = scmp.eq.s32.totalorder %s26, 0
      %p89 = por %p87, %p88
      %p90 = scmp.ne.s32.totalorder %s78, %s79
      %p91 = scmp.eq.s32.totalorder %s27, 1
      %p92 = por %p90, %p91
      %p94 = scmp.ne.s32.totalorder %s79, %s93
      %p95 = scmp.eq.s32.totalorder %s27, 0
      %p96 = por %p94, %p95
      %s97 = ssub.s32 %s21, %s28
      %p98 = scmp.eq.s32.totalorder %s97, 0
      %s100 = sadd.s32 %s99, 1
      %s101 = scalar_select %p98, %s99, %s100
      %p104 = pneg %p98
      %p105 = scmp.eq.s32.totalorder %s21, 1
      %p106 = por %p104, %p105
      %p107 = scmp.ne.s32.totalorder %s99, %s102
      %p108 = scmp.eq.s32.totalorder %s21, 0
      %p109 = por %p107, %p108
      %p110 = scmp.ne.s32.totalorder %s99, %s102
      %p111 = scmp.eq.s32.totalorder %s26, 1
      %p112 = por %p110, %p111
      %p113 = scmp.ne.s32.totalorder %s102, %s103
      %p114 = scmp.eq.s32.totalorder %s26, 0
      %p115 = por %p113, %p114
      %p116 = scmp.ne.s32.totalorder %s102, %s103
      %p117 = scmp.eq.s32.totalorder %s27, 1
      %p118 = por %p116, %p117
      %p120 = scmp.ne.s32.totalorder %s103, %s119
      %p121 = scmp.eq.s32.totalorder %s27, 0
      %p122 = por %p120, %p121
      %s123 = ssub.s32 %s21, %s28
      %p124 = scmp.eq.s32.totalorder %s123, 0
      %s126 = sadd.s32 %s125, 1
      %s127 = scalar_select %p124, %s125, %s126
      %p130 = pneg %p124
      %p131 = scmp.eq.s32.totalorder %s21, 1
      %p132 = por %p130, %p131
      %p133 = scmp.ne.s32.totalorder %s125, %s128
      %p134 = scmp.eq.s32.totalorder %s21, 0
      %p135 = por %p133, %p134
      %p136 = scmp.ne.s32.totalorder %s125, %s128
      %p137 = scmp.eq.s32.totalorder %s26, 1
      %p138 = por %p136, %p137
      %p139 = scmp.ne.s32.totalorder %s128, %s129
      %p140 = scmp.eq.s32.totalorder %s26, 0
      %p141 = por %p139, %p140
      %p142 = scmp.ne.s32.totalorder %s128, %s129
      %p143 = scmp.eq.s32.totalorder %s27, 1
      %p144 = por %p142, %p143
      %p146 = scmp.ne.s32.totalorder %s129, %s145
      %p147 = scmp.eq.s32.totalorder %s27, 0
      %p148 = por %p146, %p147
      %p149 = scmp.le.s32.totalorder 1, %s21
      %p150 = scmp.lt.s32.totalorder %s21, 3
      %p151 = pnand %p149, %p150
      %p152 = pneg %p151
      // Predicated region
      $region9: #{tpu_custom_call.1} parent=5 // pred_check
        _
      $region10: #{tpu_custom_call.1} parent=5 // pred_check_branch
        %154 = sbr.rel (%p151) target = $region12
      $region11: #{tpu_custom_call.1} parent=5 // pred_region
        %s155 = ssub.s32 %s21, 1
        // Predicated region
        $region13: #{tpu_custom_call.1} parent=11 // pred_check
          %p156 = pneg %p68
        $region14: #{tpu_custom_call.1} parent=11 // pred_check_branch
          %158 = sbr.rel (%p156) target = $region16
        $region15: #{tpu_custom_call.1} parent=11 // pred_region
          %s160 = ssub.s32 512, 512
          %161 = vsyncadd [#allocation6], %s160
          %s162 = sshll.u32 [#allocation5], 4
          %s163 = int_to_ptr.vmem [resolvable:$true] %s162
          %168 = dma.hbm_to_vmem [thread:$0]  %s1, 512, %s163, [#allocation6], 128, 128, 8
        $region16: #{tpu_custom_call.1} parent=11 // pred_fallthru
          _
        // Predicated region
        $region17: #{tpu_custom_call.1} parent=11 // pred_check
          %p169 = pneg %p89
        $region18: #{tpu_custom_call.1} parent=11 // pred_check_branch
          %171 = sbr.rel (%p169) target = $region20
        $region19: #{tpu_custom_call.1} parent=11 // pred_region
          _
        $region20: #{tpu_custom_call.1} parent=11 // pred_fallthru
          _
      $region12: #{tpu_custom_call.1} parent=5 // pred_fallthru
        _
      %p172 = scmp.lt.s32.totalorder %s21, 2
      // Predicated region
      $region21: #{tpu_custom_call.1} parent=5 // pred_check
        %p173 = pneg %p172
      $region22: #{tpu_custom_call.1} parent=5 // pred_check_branch
        %175 = sbr.rel (%p173) target = $region24
      $region23: #{tpu_custom_call.1} parent=5 // pred_region
        // Predicated region
        $region25: #{tpu_custom_call.1} parent=23 // pred_check
          %p176 = pneg %p41
        $region26: #{tpu_custom_call.1} parent=23 // pred_check_branch
          %178 = sbr.rel (%p176) target = $region28
        $region27: #{tpu_custom_call.1} parent=23 // pred_region
          %s179 = sand.u32 %s31, 1
          %s180 = scalar_lea.sflag [#allocation3], %s179
          %s181 = sand.u32 %s31, 1
          %s182 = smul.addr %s181, 8
          %s183 = scalar_lea.vmem [#allocation2], %s182
          %s185 = ssub.s32 128, 128
          %186 = vsyncadd %s180, %s185
          %s187 = smul.addr %s21, 128
          %s188 = scalar_lea.hbm %s0, %s187
          %s190 = sshll.u32 %s183, 4
          %s191 = int_to_ptr.vmem [resolvable:$true] %s190
          %193 = dma.hbm_to_vmem [thread:$0]  %s188, 128, %s191, %s180
        $region28: #{tpu_custom_call.1} parent=23 // pred_fallthru
          _
      $region24: #{tpu_custom_call.1} parent=5 // pred_fallthru
        _
      %p194 = scmp.le.s32.totalorder 1, %s21
      %p195 = scmp.lt.s32.totalorder %s21, 3
      %p196 = pnand %p194, %p195
      %p197 = pneg %p196
      // Predicated region
      $region29: #{tpu_custom_call.1} parent=5 // pred_check
        _
      $region30: #{tpu_custom_call.1} parent=5 // pred_check_branch
        %199 = sbr.rel (%p196) target = $region32
      $region31: #{tpu_custom_call.1} parent=5 // pred_region
        %s200 = ssub.s32 %s21, 1
        %s201 = sand.u32 %s34, 1
        %s202 = scalar_lea.sflag [#allocation3], %s201
        %s203 = sand.u32 %s34, 1
        %s204 = smul.addr %s203, 8
        %s205 = scalar_lea.vmem [#allocation2], %s204
        // Predicated region
        $region33: #{tpu_custom_call.1} parent=31 // pred_check
          %p206 = pneg %p47
        $region34: #{tpu_custom_call.1} parent=31 // pred_check_branch
          %208 = sbr.rel (%p206) target = $region36
        $region35: #{tpu_custom_call.1} parent=31 // pred_region
          %209 = dma.done %s202, 128
        $region36: #{tpu_custom_call.1} parent=31 // pred_fallthru
          _
        // Predicated region
        $region37: #{tpu_custom_call.1} parent=31 // pred_check
          %p210 = pneg %p68
        $region38: #{tpu_custom_call.1} parent=31 // pred_check_branch
          %212 = sbr.rel (%p210) target = $region40
        $region39: #{tpu_custom_call.1} parent=31 // pred_region
          %213 = dma.done [#allocation6], 512
        $region40: #{tpu_custom_call.1} parent=31 // pred_fallthru
          _
        %s214 = sand.u32 %s34, 1
        %s215 = scalar_lea.sflag [#allocation3], %s214
        %s216 = sand.u32 %s34, 1
        %s217 = smul.addr %s216, 8
        %s218 = scalar_lea.vmem [#allocation2], %s217
        %p219 = pneg %p47
        %p220 = pneg %p44
        %p221 = pneg %p68
        %p222 = pneg %p65
        %p223 = pneg %p89
        %p224 = pneg %p86
        %p225 = pneg %p115
        %p226 = pneg %p112
        %s227 = sand.u32 %s102, 1
        %s228 = scalar_lea.sflag [#allocation4], %s227
        %s229 = sand.u32 %s102, 1
        %s230 = smul.addr %s229, 8
        %s231 = scalar_lea.vmem [#allocation7], %s230
        %p232 = pneg %p141
        %p233 = pneg %p138
        %s234 = sand.u32 %s128, 1
        %s235 = scalar_lea.sflag [#allocation9], %s234
        %s236 = sand.u32 %s128, 1
        %s237 = smul.addr %s236, 8
        %s238 = scalar_lea.vmem [#allocation8], %s237
        %v239 = vld [vmem:[%s205] sm:$0xff]
        %v240 = vld [vmem:[#allocation5] sm:$0xff]
        %v241 = vld [vmem:[#allocation5 + $0x8] sm:$0xff]
        %v242 = vld [vmem:[#allocation5 + $0x10] sm:$0xff]
        %v243 = vld [vmem:[#allocation5 + $0x18] sm:$0xff]
        %v244 = vld [vmem:[%s2] sm:$0x1]
        %v246 = vlaneseq
        %v247 = vshrl.u32 %v246, 7
        %v248 = vsub.s32 0, %v247
        %v249 = vrot.slane %v244, %v248
        %vm251 = vcmask 261120
        %v253 = vsel %vm251, %v239, 0
        %255 = vmatprep.subr.mxu0 0.0
        %256 = vmatpush1.msra.mxu0 0.0
        %257 = vmatprep.subr.mxu0 0.0
        %258 = vmatpush1.msra.mxu0 0.0
        %259 = vmatprep.subr.mxu0 0.0
        %260 = vmatpush1.msra.mxu0 0.0
        %261 = vmatprep.subr.mxu0 0.0
        %262 = vmatpush1.msra.mxu0 0.0
        %263 = vmatprep.subr.mxu0 0.0
        %264 = vmatpush1.msra.mxu0 0.0
        %265 = vmatprep.subr.mxu0 0.0
        %266 = vmatpush1.msra.mxu0 0.0
        %267 = vmatprep.subr.mxu0 0.0
        %268 = vmatpush1.msra.mxu0 0.0
        %269 = vmatprep.subr.mxu0 0.0
        %270 = vmatpush1.msra.mxu0 0.0
        %271 = vmatprep.subr.mxu0 0.0
        %272 = vmatpush1.msra.mxu0 0.0
        %273 = vmatprep.subr.mxu0 0.0
        %274 = vmatpush1.msra.mxu0 0.0
        %275 = vmatprep.subr.mxu0 0.0
        %276 = vmatpush1.msra.mxu0 0.0
        %277 = vmatprep.subr.mxu0 0.0
        %278 = vmatpush1.msra.mxu0 0.0
        %279 = vmatprep.subr.mxu0 0.0
        %280 = vmatpush1.msra.mxu0 %v243
        %281 = vmatprep.subr.mxu0 0.0
        %282 = vmatpush1.msra.mxu0 %v242
        %283 = vmatprep.subr.mxu0 0.0
        %284 = vmatpush1.msra.mxu0 %v241
        %285 = vmatprep.subr.mxu0 0.0
        %286 = vmatpush1.msra.mxu0 %v240
        %287 = vmatprep.subr.mxu0 0.0
        %288 = vmatpush2.msra.mxu0 0.0
        %289 = vmatprep.subr.mxu0 0.0
        %290 = vmatpush2.msra.mxu0 0.0
        %291 = vmatprep.subr.mxu0 0.0
        %292 = vmatpush2.msra.mxu0 0.0
        %293 = vmatprep.subr.mxu0 0.0
        %294 = vmatpush2.msra.mxu0 0.0
        %295 = vmatprep.subr.mxu0 0.0
        %296 = vmatpush2.msra.mxu0 0.0
        %297 = vmatprep.subr.mxu0 0.0
        %298 = vmatpush2.msra.mxu0 0.0
        %299 = vmatprep.subr.mxu0 0.0
        %300 = vmatpush2.msra.mxu0 0.0
        %301 = vmatprep.subr.mxu0 0.0
        %302 = vmatpush2.msra.mxu0 0.0
        %303 = vmatprep.subr.mxu0 0.0
        %304 = vmatpush2.msra.mxu0 0.0
        %305 = vmatprep.subr.mxu0 0.0
        %306 = vmatpush2.msra.mxu0 0.0
        %307 = vmatprep.subr.mxu0 0.0
        %308 = vmatpush2.msra.mxu0 0.0
        %309 = vmatprep.subr.mxu0 0.0
        %310 = vmatpush2.msra.mxu0 0.0
        %311 = vmatprep.subr.mxu0 0.0
        %312 = vmatpush2.msra.mxu0 0.0
        %313 = vmatprep.subr.mxu0 0.0
        %314 = vmatpush2.msra.mxu0 0.0
        %315 = vmatprep.subr.mxu0 0.0
        %316 = vmatpush2.msra.mxu0 0.0
        %317 = vmatprep.subr.mxu0 0.0
        %318 = vmatpush2.msra.mxu0 0.0
        %319 = vmatprep.mubr.f32.mxu0 0.0
        %320 = vmatmul.mubr.f32.gmra.mxu0 %v253
        %v321 = vpop.f32.mrf.mxu0
        %v322 = vadd.f32 %v249, %v321
        %v323 = vpop.f32.mrf.mxu0
        %324 = vdwg.mxu0
        %vm325 = vcmask 130048
        %v326 = vsel %vm325, %v322, -inf
        %327 = vmax.xlane.f32.xlu0 %v326
        %v328 = vpop.xlane.xlu0 %327
        %v329 = vsub.f32 %v322, %v328
        %v330 = vmul.f32 %v329, 1.442695
        %v331 = vpow.pop %v330
        %v332 = vsel %vm325, %v331, 0.0
        %333 = vadd.xlane.f32.xlu0 %v332
        %v334 = vpop.xlane.xlu0 %333
        %v335 = vrcp.pop %v334
        %v336 = vmul.f32 %v331, %v335
        %vm337 = vcmask 261248
        %v338 = vsel %vm337, %v322, -inf
        %339 = vmax.xlane.f32.xlu0 %v338
        %v340 = vpop.xlane.xlu0 %339
        %v341 = vsub.f32 %v322, %v340
        %v342 = vmul.f32 %v341, 1.442695
        %v343 = vpow.pop %v342
        %345 = vrot.lane.b32.xlu0 %v343, 112
        %v346 = vpop.permute.xlu0 %345
        %v348 = vsel %vm325, %v346, 0.0
        %349 = vadd.xlane.f32.xlu0 %v348
        %v350 = vpop.xlane.xlu0 %349
        %v351 = vrcp.pop %v350
        %v352 = vmul.f32 %v343, %v351
        %354 = vrot.lane.b32.xlu0 %v352, 112
        %v355 = vpop.permute.xlu0 %354
        %v357 = vadd.f32 %v336, %v355
        %vm358 = vcmask 392448
        %v359 = vsel %vm358, %v322, -inf
        %360 = vmax.xlane.f32.xlu0 %v359
        %v361 = vpop.xlane.xlu0 %360
        %v362 = vsub.f32 %v322, %v361
        %v363 = vmul.f32 %v362, 1.442695
        %v364 = vpow.pop %v363
        %366 = vrot.lane.b32.xlu0 %v364, 96
        %v367 = vpop.permute.xlu0 %366
        %v369 = vsel %vm325, %v367, 0.0
        %370 = vadd.xlane.f32.xlu0 %v369
        %v371 = vpop.xlane.xlu0 %370
        %v372 = vrcp.pop %v371
        %v373 = vmul.f32 %v364, %v372
        %375 = vrot.lane.b32.xlu0 %v373, 96
        %v376 = vpop.permute.xlu0 %375
        %v378 = vadd.f32 %v357, %v376
        %v379 = vsel %vm325, %v336, %v352
        %v380 = vsel %vm251, %v379, %v373
        %vm381 = vcmask 392192
        %382 = vst.msk [vmem:[%s238] sm:$0xff] %vm381, %v380
        %v383 = vmul.f32 %v378, 0.33333334
        %v384 = vmax.f32 %v383, 1.1754944e-38
        %385 = vst.msk [vmem:[%s231] sm:$0xff] %vm325, %v384
        %s386 = sand.u32 %s102, 1
        %s387 = scalar_lea.sflag [#allocation4], %s386
        %s388 = sand.u32 %s102, 1
        %s389 = smul.addr %s388, 8
        %s390 = scalar_lea.vmem [#allocation7], %s389
        %s391 = sand.u32 %s128, 1
        %s392 = scalar_lea.sflag [#allocation9], %s391
        %s393 = sand.u32 %s128, 1
        %s394 = smul.addr %s393, 8
        %s395 = scalar_lea.vmem [#allocation8], %s394
        // Predicated region
        $region41: #{tpu_custom_call.1} parent=31 // pred_check
          %p396 = pneg %p112
        $region42: #{tpu_custom_call.1} parent=31 // pred_check_branch
          %398 = sbr.rel (%p396) target = $region44
        $region43: #{tpu_custom_call.1} parent=31 // pred_region
          %s400 = ssub.s32 128, 128
          %401 = vsyncadd %s387, %s400
          %s402 = smul.addr %s26, 128
          %s403 = scalar_lea.hbm %s3, %s402
          %s405 = sshll.u32 %s390, 4
          %s406 = int_to_ptr.vmem [resolvable:$true] %s405
          %408 = dma.vmem_to_hbm [thread:$0]  %s406, 128, %s403, %s387
        $region44: #{tpu_custom_call.1} parent=31 // pred_fallthru
          _
        // Predicated region
        $region45: #{tpu_custom_call.1} parent=31 // pred_check
          %p409 = pneg %p138
        $region46: #{tpu_custom_call.1} parent=31 // pred_check_branch
          %411 = sbr.rel (%p409) target = $region48
        $region47: #{tpu_custom_call.1} parent=31 // pred_region
          %s413 = ssub.s32 128, 128
          %414 = vsyncadd %s392, %s413
          %s415 = smul.addr %s26, 128
          %s416 = scalar_lea.hbm %s4, %s415
          %s418 = sshll.u32 %s395, 4
          %s419 = int_to_ptr.vmem [resolvable:$true] %s418
          %421 = dma.vmem_to_hbm [thread:$0]  %s419, 128, %s416, %s392
        $region48: #{tpu_custom_call.1} parent=31 // pred_fallthru
          _
      $region32: #{tpu_custom_call.1} parent=5 // pred_fallthru
        _
      %p422 = scmp.le.s32.totalorder 2, %s21
      // Predicated region
      $region49: #{tpu_custom_call.1} parent=5 // pred_check
        %p423 = pneg %p422
      $region50: #{tpu_custom_call.1} parent=5 // pred_check_branch
        %425 = sbr.rel (%p423) target = $region52
      $region51: #{tpu_custom_call.1} parent=5 // pred_region
        %s426 = ssub.s32 %s21, 2
        // Predicated region
        $region53: #{tpu_custom_call.1} parent=51 // pred_check
          %p427 = pneg %p118
        $region54: #{tpu_custom_call.1} parent=51 // pred_check_branch
          %429 = sbr.rel (%p427) target = $region56
        $region55: #{tpu_custom_call.1} parent=51 // pred_region
          %s430 = sand.u32 %s103, 1
          %s431 = scalar_lea.sflag [#allocation4], %s430
          %s432 = sand.u32 %s103, 1
          %s433 = smul.addr %s432, 8
          %s434 = scalar_lea.vmem [#allocation7], %s433
          %435 = dma.done %s431, 128
        $region56: #{tpu_custom_call.1} parent=51 // pred_fallthru
          _
        // Predicated region
        $region57: #{tpu_custom_call.1} parent=51 // pred_check
          %p436 = pneg %p144
        $region58: #{tpu_custom_call.1} parent=51 // pred_check_branch
          %438 = sbr.rel (%p436) target = $region60
        $region59: #{tpu_custom_call.1} parent=51 // pred_region
          %s439 = sand.u32 %s129, 1
          %s440 = scalar_lea.sflag [#allocation9], %s439
          %s441 = sand.u32 %s129, 1
          %s442 = smul.addr %s441, 8
          %s443 = scalar_lea.vmem [#allocation8], %s442
          %444 = dma.done %s440, 128
        $region60: #{tpu_custom_call.1} parent=51 // pred_fallthru
          _
      $region52: #{tpu_custom_call.1} parent=5 // pred_fallthru
        _
    $region6: #{tpu_custom_call.1} parent=1 // loop_footer
      %s25 = sadd.s32 1, %s21
    $region7: #{tpu_custom_call.1} parent=1 // loop_footer_branch
      %20 = sbr.rel target = $region3
    $region8: #{tpu_custom_call.1} parent=1 // loop_exit
      _
    %445 = vsyncpa [#allocation3], 1
    %s446 = scalar_lea.sflag [#allocation3], 1
    %447 = vsyncpa %s446, 1
    %448 = vsyncpa [#allocation6], 1
    %449 = vsyncpa [#allocation4], 1
    %s450 = scalar_lea.sflag [#allocation4], 1
    %451 = vsyncpa %s450, 1
    %452 = vsyncpa [#allocation9], 1
    %s453 = scalar_lea.sflag [#allocation9], 1
    %454 = vsyncpa %s453, 1

</llo_original>
